<compile_context>
chip_gen: v5e
topology: v5e:2x2
jax: 0.10.0
libtpu: 0.0.40
codegen_flags: <defaults>
</compile_context>

<pallas_src>
import jax
import jax.numpy as jnp
from jax.experimental import pallas as pl
from jax.experimental.pallas import tpu as pltpu

# PDE constants (fixed, not learned)
DX = 1.0 / 100.0
DY = 1.0 / 100.0
DT = 0.00025


def _make_rcnn_kernel(num_steps):
    """Builds the kernel body for a given (static) number of fused Euler steps.

    coef_ref: SMEM f32[6] = fully folded coefficients
              [dt*nu_u/(12dx^2), dt*nu_v/(12dx^2),
               dt*C1_u/(12dx),   dt*C2_u/(12dy),
               dt*C1_v/(12dx),   dt*C2_v/(12dy)]
    h_ref / out_ref: VMEM f32[bt, 2, H, W]  (channel 0 = u, channel 1 = v).
    """

    def kernel(coef_ref, h_ref, out_ref):
        bt, _, H, W = h_ref.shape

        # Scalar reads from SMEM, once per grid step.
        a_nu_u, a_nu_v = coef_ref[0], coef_ref[1]
        a_c1_u, a_c2_u = coef_ref[2], coef_ref[3]
        a_c1_v, a_c2_v = coef_ref[4], coef_ref[5]

        def euler_step(_, x):
            # x: (2, H, W), ch0=u, ch1=v.  Returns x after one Euler step.
            # Single-axis periodic shift helpers (XLU rotate, no padded HBM).
            def sh_h(d):  # result[..., i, :] = x[..., (i + d) % H, :]
                return pltpu.roll(x, (-d) % H, 1)

            def sh_w(d):  # result[..., :, j] = x[..., :, (j + d) % W]
                return pltpu.roll(x, (-d) % W, 2)

            # H-direction: accumulate into dxs/lap, then drop the shifted slabs
            # before building the W-direction slabs (bounds vreg live range).
            p1, m1 = sh_h(1), sh_h(-1)
            dxs = p1 - m1
            lap = p1 + m1
            p2, m2 = sh_h(2), sh_h(-2)
            dxs = 8.0 * dxs - (p2 - m2)          # == 12*dx * d/dx
            lap = 16.0 * lap - (p2 + m2)

            # W-direction.
            p1, m1 = sh_w(1), sh_w(-1)
            dys = p1 - m1
            lap = lap + 16.0 * (p1 + m1)
            p2, m2 = sh_w(2), sh_w(-2)
            dys = 8.0 * dys - (p2 - m2)          # == 12*dy * d/dy
            lap = lap - (p2 + m2) - 60.0 * x     # == 12*dx^2 * laplace

            u = x[0:1]
            v = x[1:2]
            # explicit Euler with all scales pre-folded into a_* coefficients
            u_n = (u + a_nu_u * lap[0:1]
                   + (a_c1_u * u) * dxs[0:1] + (a_c2_u * v) * dys[0:1])
            v_n = (v + a_nu_v * lap[1:2]
                   + (a_c1_v * u) * dxs[1:2] + (a_c2_v * v) * dys[1:2])
            return jnp.concatenate([u_n, v_n], axis=0)

        def one_item(b):
            x = h_ref[b]                              # (2, H, W)
            if num_steps == 1:
                x = euler_step(0, x)
            else:
                # Fused rollout: state stays in registers/VMEM for T steps.
                x = jax.lax.fori_loop(0, num_steps, euler_step, x)
            out_ref[b] = x

        if bt == 1:
            one_item(0)
        else:
            def batch_body(b, carry):
                one_item(b)
                return carry
            jax.lax.fori_loop(0, bt, batch_body, 0, unroll=(bt <= 8))

    return kernel


def _target_block_bytes():
    """Generation-aware per-block byte budget (fits 2 in + 2 out pipeline bufs)."""
    try:
        kind = jax.devices()[0].device_kind.lower()
    except Exception:  # pragma: no cover - defensive
        kind = ""
    if "v5" in kind:
        return 1 << 20   # v5e: HBM-bound (~0.82 TB/s), 16 MiB scoped-VMEM default
    if "v7" in kind:
        return 6 << 20   # v7x: 3.2 TB/s HBM -> amortize ~0.35us/step with big tiles
    return 2 << 20       # v6e / default


def _pick_batch_tile(B, item_bytes, target_bytes, min_grid_steps=2):
    """Largest batch tile under the VMEM budget, keeping >=2 grid steps when
    possible so both v7x TensorCores get work.  Grid uses cdiv, so odd/prime B
    no longer collapses to bt=1 (last block may be ragged; OOB writes drop)."""
    cap = max(1, target_bytes // item_bytes)
    if B >= min_grid_steps:
        cap = min(cap, max(1, B // min_grid_steps))
    return max(1, min(B, cap))


def rcnn_cell_forward(h, coefs, num_steps=1):
    """h: [B, 2, H, W]; coefs: f32[6] = [nu_u, nu_v, C1_u, C2_u, C1_v, C2_v].
    Returns (ch, ch) like the torch module's forward().  num_steps>1 fuses T
    explicit-Euler steps into one pallas_call (HBM traffic / T)."""
    B, C, H, W = h.shape
    assert C == 2, "RCNNCell expects 2 channels (u, v)"
    num_steps = int(num_steps)
    h = h.astype(jnp.float32)

    # Fold DT and the fixed FD resolutions into the learned coefficients
    # (host side, 6 floats) so in-kernel stencils use raw integer weights.
    scale = jnp.array(
        [DT / (12.0 * DX * DX), DT / (12.0 * DX * DX),   # nu_u, nu_v   (laplace)
         DT / (12.0 * DX),      DT / (12.0 * DY),        # C1_u (d/dx), C2_u (d/dy)
         DT / (12.0 * DX),      DT / (12.0 * DY)],       # C1_v (d/dx), C2_v (d/dy)
        dtype=jnp.float32)
    coefs_folded = coefs.astype(jnp.float32) * scale

    bt = _pick_batch_tile(B, C * H * W * 4, _target_block_bytes())
    block = (bt, C, H, W)
    # Periodic wrap via pltpu.roll is only correct because every block spans
    # the FULL H and W extents; never tile H/W without adding a halo exchange.
    assert block[1:] == (C, H, W)
    grid = (pl.cdiv(B, bt),)

    block_bytes = bt * C * H * W * 4
    cp_kwargs = dict(dimension_semantics=("parallel",))      # megacore split (v7x)
    vmem_needed = 4 * block_bytes + (2 << 20)                  # 2 in + 2 out bufs
    if vmem_needed > (16 << 20):                               # above v5e scoped default
        cp_kwargs["vmem_limit_bytes"] = int(min(vmem_needed + (8 << 20), 48 << 20))

    ch = pl.pallas_call(
        _make_rcnn_kernel(num_steps),
        out_shape=jax.ShapeDtypeStruct((B, C, H, W), jnp.float32),
        grid=grid,
        in_specs=[
            pl.BlockSpec(memory_space=pltpu.MemorySpace.SMEM),   # 6 folded coefs
            pl.BlockSpec(block, lambda b: (b, 0, 0, 0)),          # fused u/v block
        ],
        out_specs=pl.BlockSpec(block, lambda b: (b, 0, 0, 0)),
        compiler_params=pltpu.CompilerParams(**cp_kwargs),
    )(coefs_folded, h)
    return ch, ch


def _reference_forward(h, coefs):
    """Pure-JAX reference of the PyTorch forward (circular conv via roll)."""
    u = h[:, 0]
    v = h[:, 1]
    nu_u, nu_v, c1_u, c2_u, c1_v, c2_v = [coefs[i] for i in range(6)]

    def sh(a, dh, dw):
        return jnp.roll(a, shift=(-dh, -dw), axis=(1, 2))

    def dx_op(a):
        return ((1 / 12) * sh(a, -2, 0) - (8 / 12) * sh(a, -1, 0)
                + (8 / 12) * sh(a, 1, 0) - (1 / 12) * sh(a, 2, 0)) / DX

    def dy_op(a):
        return ((1 / 12) * sh(a, 0, -2) - (8 / 12) * sh(a, 0, -1)
                + (8 / 12) * sh(a, 0, 1) - (1 / 12) * sh(a, 0, 2)) / DY

    def lap_op(a):
        return ((-1 / 12) * (sh(a, -2, 0) + sh(a, 2, 0) + sh(a, 0, -2) + sh(a, 0, 2))
                + (4 / 3) * (sh(a, -1, 0) + sh(a, 1, 0) + sh(a, 0, -1) + sh(a, 0, 1))
                - 5.0 * a) / (DX * DX)

    f_u = nu_u * lap_op(u) + c1_u * u * dx_op(u) + c2_u * v * dy_op(u)
    f_v = nu_v * lap_op(v) + c1_v * u * dx_op(v) + c2_v * v * dy_op(v)
    u_next = u + DT * f_u
    v_next = v + DT * f_v
    return jnp.stack([u_next, v_next], axis=1)


if __name__ == "__main__":
    # deterministic parameter init: values from RCNNCell.__init__
    coefs = jnp.array([0.005194, 0.00531,      # nu_u, nu_v
                       -0.99013, -0.99245,     # C1_u, C2_u
                       -0.97758, -0.97639],    # C1_v, C2_v
                      dtype=jnp.float32)

    # small deterministic input: [batch=2, channel=2(u,v), H=16, W=128]
    # (W chosen as a lane multiple so output stores are lane-dense)
    key = jax.random.PRNGKey(0)
    h = jax.random.normal(key, (2, 2, 16, 128), dtype=jnp.float32)

    fwd = jax.jit(rcnn_cell_forward, static_argnames=("num_steps",))

    # --- single step (matches the torch module's forward exactly) ---
    ch, ch2 = fwd(h, coefs, num_steps=1)
    ch = jax.block_until_ready(ch)
    ref = _reference_forward(h, coefs)
    assert ch.shape == h.shape
    assert jnp.allclose(ch, ref, rtol=1e-5, atol=1e-5), "mismatch vs reference"

    # --- fused rollout: 4 Euler steps in one pallas_call vs iterated reference ---
    T = 4
    ch_t, _ = fwd(h, coefs, num_steps=T)
    ch_t = jax.block_until_ready(ch_t)
    ref_t = h
    for _ in range(T):
        ref_t = _reference_forward(ref_t, coefs)
    assert jnp.allclose(ch_t, ref_t, rtol=1e-4, atol=1e-4), "rollout mismatch"

    print("KERNEL_OK")
</pallas_src>

<mosaic_0001>
module attributes {stable_mosaic.version = 11 : i64} {
  func.func @kernel(%arg0: i32, %arg1: memref<6xf32, #tpu.memory_space<smem>>, %arg2: memref<1x2x16x128xf32, #tpu.memory_space<vmem>>, %arg3: memref<1x2x16x128xf32, #tpu.memory_space<vmem>>) attributes {dimension_semantics = [#tpu.dimension_semantics<parallel>], iteration_bounds = array<i64: 2>, scalar_prefetch = 0 : i64, scratch_operands = 0 : i64, tpu.core_type = #tpu.core_type<tc>, window_params = [{transform_indices = @transform_0, window_bounds = array<i64: 6>}, {transform_indices = @transform_1, window_bounds = array<i64: 1, 2, 16, 128>}, {transform_indices = @transform_2, window_bounds = array<i64: 1, 2, 16, 128>}]} {
    %c0 = arith.constant 0 : index
    %0 = memref.load %arg1[%c0] : memref<6xf32, #tpu.memory_space<smem>>
    %c1 = arith.constant 1 : index
    %1 = memref.load %arg1[%c1] : memref<6xf32, #tpu.memory_space<smem>>
    %c2 = arith.constant 2 : index
    %2 = memref.load %arg1[%c2] : memref<6xf32, #tpu.memory_space<smem>>
    %c3 = arith.constant 3 : index
    %3 = memref.load %arg1[%c3] : memref<6xf32, #tpu.memory_space<smem>>
    %c4 = arith.constant 4 : index
    %4 = memref.load %arg1[%c4] : memref<6xf32, #tpu.memory_space<smem>>
    %c5 = arith.constant 5 : index
    %5 = memref.load %arg1[%c5] : memref<6xf32, #tpu.memory_space<smem>>
    %c0_0 = arith.constant 0 : index
    %c0_1 = arith.constant 0 : index
    %c0_2 = arith.constant 0 : index
    %c0_3 = arith.constant 0 : index
    %6 = vector.load %arg2[%c0_0, %c0_1, %c0_2, %c0_3] : memref<1x2x16x128xf32, #tpu.memory_space<vmem>>, vector<1x2x16x128xf32>
    %7 = vector.shape_cast %6 : vector<1x2x16x128xf32> to vector<2x16x128xf32>
    %c15_i32 = arith.constant 15 : i32
    %8 = tpu.dynamic_rotate %7 by %c15_i32 dim 1 : vector<2x16x128xf32>, i32 -> vector<2x16x128xf32>
    %c1_i32 = arith.constant 1 : i32
    %9 = tpu.dynamic_rotate %7 by %c1_i32 dim 1 : vector<2x16x128xf32>, i32 -> vector<2x16x128xf32>
    %10 = arith.subf %8, %9 : vector<2x16x128xf32>
    %11 = arith.addf %8, %9 : vector<2x16x128xf32>
    %c14_i32 = arith.constant 14 : i32
    %12 = tpu.dynamic_rotate %7 by %c14_i32 dim 1 : vector<2x16x128xf32>, i32 -> vector<2x16x128xf32>
    %c2_i32 = arith.constant 2 : i32
    %13 = tpu.dynamic_rotate %7 by %c2_i32 dim 1 : vector<2x16x128xf32>, i32 -> vector<2x16x128xf32>
    %cst = arith.constant 8.000000e+00 : f32
    %14 = vector.broadcast %cst : f32 to vector<2x16x128xf32>
    %15 = arith.mulf %14, %10 : vector<2x16x128xf32>
    %16 = arith.subf %12, %13 : vector<2x16x128xf32>
    %17 = arith.subf %15, %16 : vector<2x16x128xf32>
    %cst_4 = arith.constant 1.600000e+01 : f32
    %18 = vector.broadcast %cst_4 : f32 to vector<2x16x128xf32>
    %19 = arith.mulf %18, %11 : vector<2x16x128xf32>
    %20 = arith.addf %12, %13 : vector<2x16x128xf32>
    %21 = arith.subf %19, %20 : vector<2x16x128xf32>
    %c127_i32 = arith.constant 127 : i32
    %22 = tpu.dynamic_rotate %7 by %c127_i32 dim 2 : vector<2x16x128xf32>, i32 -> vector<2x16x128xf32>
    %c1_i32_5 = arith.constant 1 : i32
    %23 = tpu.dynamic_rotate %7 by %c1_i32_5 dim 2 : vector<2x16x128xf32>, i32 -> vector<2x16x128xf32>
    %24 = arith.subf %22, %23 : vector<2x16x128xf32>
    %25 = arith.addf %22, %23 : vector<2x16x128xf32>
    %cst_6 = arith.constant 1.600000e+01 : f32
    %26 = vector.broadcast %cst_6 : f32 to vector<2x16x128xf32>
    %27 = arith.mulf %26, %25 : vector<2x16x128xf32>
    %28 = arith.addf %21, %27 : vector<2x16x128xf32>
    %c126_i32 = arith.constant 126 : i32
    %29 = tpu.dynamic_rotate %7 by %c126_i32 dim 2 : vector<2x16x128xf32>, i32 -> vector<2x16x128xf32>
    %c2_i32_7 = arith.constant 2 : i32
    %30 = tpu.dynamic_rotate %7 by %c2_i32_7 dim 2 : vector<2x16x128xf32>, i32 -> vector<2x16x128xf32>
    %cst_8 = arith.constant 8.000000e+00 : f32
    %31 = vector.broadcast %cst_8 : f32 to vector<2x16x128xf32>
    %32 = arith.mulf %31, %24 : vector<2x16x128xf32>
    %33 = arith.subf %29, %30 : vector<2x16x128xf32>
    %34 = arith.subf %32, %33 : vector<2x16x128xf32>
    %35 = arith.addf %29, %30 : vector<2x16x128xf32>
    %36 = arith.subf %28, %35 : vector<2x16x128xf32>
    %cst_9 = arith.constant 6.000000e+01 : f32
    %37 = vector.broadcast %cst_9 : f32 to vector<2x16x128xf32>
    %38 = arith.mulf %37, %7 : vector<2x16x128xf32>
    %39 = arith.subf %36, %38 : vector<2x16x128xf32>
    %40 = vector.extract_strided_slice %7 {offsets = [0, 0, 0], sizes = [1, 16, 128], strides = [1, 1, 1]} : vector<2x16x128xf32> to vector<1x16x128xf32>
    %41 = vector.extract_strided_slice %7 {offsets = [1, 0, 0], sizes = [1, 16, 128], strides = [1, 1, 1]} : vector<2x16x128xf32> to vector<1x16x128xf32>
    %42 = vector.extract_strided_slice %39 {offsets = [0, 0, 0], sizes = [1, 16, 128], strides = [1, 1, 1]} : vector<2x16x128xf32> to vector<1x16x128xf32>
    %43 = vector.broadcast %0 : f32 to vector<1x16x128xf32>
    %44 = arith.mulf %43, %42 : vector<1x16x128xf32>
    %45 = arith.addf %40, %44 : vector<1x16x128xf32>
    %46 = vector.broadcast %2 : f32 to vector<1x16x128xf32>
    %47 = arith.mulf %46, %40 : vector<1x16x128xf32>
    %48 = vector.extract_strided_slice %17 {offsets = [0, 0, 0], sizes = [1, 16, 128], strides = [1, 1, 1]} : vector<2x16x128xf32> to vector<1x16x128xf32>
    %49 = arith.mulf %47, %48 : vector<1x16x128xf32>
    %50 = arith.addf %45, %49 : vector<1x16x128xf32>
    %51 = vector.broadcast %3 : f32 to vector<1x16x128xf32>
    %52 = arith.mulf %51, %41 : vector<1x16x128xf32>
    %53 = vector.extract_strided_slice %34 {offsets = [0, 0, 0], sizes = [1, 16, 128], strides = [1, 1, 1]} : vector<2x16x128xf32> to vector<1x16x128xf32>
    %54 = arith.mulf %52, %53 : vector<1x16x128xf32>
    %55 = arith.addf %50, %54 : vector<1x16x128xf32>
    %56 = vector.extract_strided_slice %39 {offsets = [1, 0, 0], sizes = [1, 16, 128], strides = [1, 1, 1]} : vector<2x16x128xf32> to vector<1x16x128xf32>
    %57 = vector.broadcast %1 : f32 to vector<1x16x128xf32>
    %58 = arith.mulf %57, %56 : vector<1x16x128xf32>
    %59 = arith.addf %41, %58 : vector<1x16x128xf32>
    %60 = vector.broadcast %4 : f32 to vector<1x16x128xf32>
    %61 = arith.mulf %60, %40 : vector<1x16x128xf32>
    %62 = vector.extract_strided_slice %17 {offsets = [1, 0, 0], sizes = [1, 16, 128], strides = [1, 1, 1]} : vector<2x16x128xf32> to vector<1x16x128xf32>
    %63 = arith.mulf %61, %62 : vector<1x16x128xf32>
    %64 = arith.addf %59, %63 : vector<1x16x128xf32>
    %65 = vector.broadcast %5 : f32 to vector<1x16x128xf32>
    %66 = arith.mulf %65, %41 : vector<1x16x128xf32>
    %67 = vector.extract_strided_slice %34 {offsets = [1, 0, 0], sizes = [1, 16, 128], strides = [1, 1, 1]} : vector<2x16x128xf32> to vector<1x16x128xf32>
    %68 = arith.mulf %66, %67 : vector<1x16x128xf32>
    %69 = arith.addf %64, %68 : vector<1x16x128xf32>
    %70 = tpu.concatenate %55, %69 in 0 : vector<1x16x128xf32>, vector<1x16x128xf32> -> vector<2x16x128xf32>
    %c0_10 = arith.constant 0 : index
    %c0_11 = arith.constant 0 : index
    %c0_12 = arith.constant 0 : index
    %c0_13 = arith.constant 0 : index
    %71 = vector.load %arg3[%c0_10, %c0_11, %c0_12, %c0_13] : memref<1x2x16x128xf32, #tpu.memory_space<vmem>>, vector<1x2x16x128xf32>
    %72 = vector.shape_cast %71 : vector<1x2x16x128xf32> to vector<2x16x128xf32>
    %73 = vector.shape_cast %70 : vector<2x16x128xf32> to vector<1x2x16x128xf32>
    tpu.vector_store %arg3[%c0_10, %c0_11, %c0_12, %c0_13], %73 {strides = array<i32>} : memref<1x2x16x128xf32, #tpu.memory_space<vmem>>, vector<1x2x16x128xf32>,
    return
  }
  func.func @transform_0(%arg0: i32) -> i32 {
    %c0_i32 = arith.constant 0 : i32
    %c0_i32_0 = arith.constant 0 : i32
    return %c0_i32 : i32
  }
  func.func @transform_1(%arg0: i32) -> (i32, i32, i32, i32) {
    %c0_i32 = arith.constant 0 : i32
    %c0_i32_0 = arith.constant 0 : i32
    %c0_i32_1 = arith.constant 0 : i32
    %c0_i32_2 = arith.constant 0 : i32
    return %arg0, %c0_i32, %c0_i32_0, %c0_i32_1 : i32, i32, i32, i32
  }
  func.func @transform_2(%arg0: i32) -> (i32, i32, i32, i32) {
    %c0_i32 = arith.constant 0 : i32
    %c0_i32_0 = arith.constant 0 : i32
    %c0_i32_1 = arith.constant 0 : i32
    %c0_i32_2 = arith.constant 0 : i32
    return %arg0, %c0_i32, %c0_i32_0, %c0_i32_1 : i32, i32, i32, i32
  }
}

</mosaic_0001>

<llo_original>
// kernel: mul.1
$region0: #{mul.1}
  #allocation2 [shape = 's32[1]{0}', space=sflag, size = 0x4, scoped, tag = 'scoped memory for mul.1']
  %s0 = inlined_call_operand.hbm [shape: f32[6], index: 0, kind: input, shape index: {}]
  %s1 = inlined_call_operand.vmem [shape: f32[6], index: 1, kind: input, shape index: {}]
  %s2 = inlined_call_operand.vmem [shape: f32[6], index: 2, kind: output, shape index: {}]
  $region1: #{mul.1} parent=0
    #allocation0 [shape = 'u8[512]{0}', space=vmem, size = 0x400, scoped, tag = 'operand span for operand 0']
    #allocation1 [shape = 's32[1]{0}', space=sflag, size = 0x4, scoped, tag = 'scoped memory for mul.1']
    %3 = vsyncpa [#allocation1], 0
    %5 = vsyncadd [#allocation1], 0
    %s7 = sshll.u32 %s0, 4
    %s8 = int_to_ptr.hbm [resolvable:$true] %s7
    %s9 = sshll.u32 [#allocation0], 4
    %s10 = int_to_ptr.vmem [resolvable:$true] %s9
    %12 = dma.hbm_to_vmem [thread:$0]  %s8, 16, %s10, [#allocation1]
    %14 = dma.done [#allocation1], 16
    %v15 = vld [vmem:[#allocation0] sm:$0x1]
    %v16 = vld [vmem:[%s1] sm:$0x1]
    %17 = xla_tuple %v15, %v16
    %18 = xla_tuple %17
    %v19 = vmul.f32 %v15, %v16
    %20 = xla_tuple %v19
    %21 = vst [vmem:[%s2] sm:$0x1] %v19
    %22 = vsyncpa [#allocation1], 1

// kernel: rcnn_cell_forward.1
$region0: #{rcnn_cell_forward.1}
  #allocation0 [shape = 'u32[]', space=smem, size = 0x4, offset = 0x4, fixed_abs, tag = 'smem constant byte address 0x4 - core index']
  #allocation1 [shape = 'u32[72,128]{1,0:T(1,128)}', space=vmem, size = 0x9000, scoped, tag = 'internal scratch']
  %s0 = inlined_call_operand.vmem [shape: f32[6], index: 0, kind: input, shape index: {}]
  %s1 = inlined_call_operand.hbm [shape: f32[2,2,16,128], index: 1, kind: input, shape index: {}]
  %s2 = inlined_call_operand.vmem [shape: f32[2,2,16,128], index: 2, kind: output, shape index: {}]
  %s3 = sld [smem:[#allocation0]]
  $region49: #{rcnn_cell_forward.1} parent=0
    _
  %s5 = ssub.s32 1, %s3
  %s6 = scalar_select 0, %s5, %s3
  $region1: #{rcnn_cell_forward.1} parent=0
    #allocation2 [shape = 'u8[512]{0}', space=smem, size = 0x200, scoped, tag = 'input window, operand 0, single buffered']
    #allocation3 [shape = 's32[2]{0}', space=sflag, size = 0x8, scoped, tag = 'scoped memory for rcnn_cell_forward.1']
    #allocation4 [shape = 's32[2]{0}', space=sflag, size = 0x8, scoped, tag = 'scoped memory for rcnn_cell_forward.1']
    #allocation5 [shape = 'u8[32768]{0}', space=vmem, size = 0x8000, scoped, tag = 'input window, operand 1']
    %7 = vsyncpa [#allocation4], 0
    %8 = vsyncpa [#allocation3], 0
    %s9 = scalar_lea.sflag [#allocation3], 1
    %10 = vsyncpa %s9, 0
    loop: start=0, step=1, limit=4
    $region2: #{rcnn_cell_forward.1} parent=1 // loop_pre_header
      _
    $region3: #{rcnn_cell_forward.1} parent=1 // loop_header
      %s12 = sphi 0, %s16
      %p13 = scmp.ge.s32.totalorder %s12, 4
      %s20 = sphi 0, %s20
      %s22 = sphi 0, %s20
      %s23 = sphi 0, %s22
      %s37 = sphi 0, %s23
      %s43 = sphi 0, %s45
      %s46 = sphi 0, %s43
      %s47 = sphi 0, %s46
      %s63 = sphi 0, %s47
      %s69 = sphi 0, %s71
      %s72 = sphi 0, %s69
      %s73 = sphi 0, %s72
      %s89 = sphi 0, %s73
    $region4: #{rcnn_cell_forward.1} parent=1 // loop_header_branch
      %15 = sbr.rel (%p13) target = $region8
    $region5: #{rcnn_cell_forward.1} parent=1 // loop_body
      %s17 = ssub.s32 %s12, 1
      %s18 = ssub.s32 %s12, 2
      %s19 = sadd.s32 %s12, 1
      %s21 = sadd.s32 %s20, 1
      %p24 = scmp.eq.s32.totalorder %s12, 1
      %p25 = scmp.ne.s32.totalorder %s20, %s22
      %p26 = scmp.eq.s32.totalorder %s12, 0
      %p27 = por %p25, %p26
      %p28 = scmp.ne.s32.totalorder %s20, %s22
      %p29 = scmp.eq.s32.totalorder %s17, 1
      %p30 = por %p28, %p29
      %p31 = scmp.ne.s32.totalorder %s22, %s23
      %p32 = scmp.eq.s32.totalorder %s17, 0
      %p33 = por %p31, %p32
      %p34 = scmp.ne.s32.totalorder %s22, %s23
      %p35 = scmp.eq.s32.totalorder %s18, 1
      %p36 = por %p34, %p35
      %p38 = scmp.ne.s32.totalorder %s23, %s37
      %p39 = scmp.eq.s32.totalorder %s18, 0
      %p40 = por %p38, %p39
      %s41 = ssub.s32 %s12, %s19
      %p42 = scmp.eq.s32.totalorder %s41, 0
      %s44 = sadd.s32 %s43, 1
      %s45 = scalar_select %p42, %s43, %s44
      %p48 = pneg %p42
      %p49 = scmp.eq.s32.totalorder %s12, 1
      %p50 = por %p48, %p49
      %p51 = scmp.ne.s32.totalorder %s43, %s46
      %p52 = scmp.eq.s32.totalorder %s12, 0
      %p53 = por %p51, %p52
      %p54 = scmp.ne.s32.totalorder %s43, %s46
      %p55 = scmp.eq.s32.totalorder %s17, 1
      %p56 = por %p54, %p55
      %p57 = scmp.ne.s32.totalorder %s46, %s47
      %p58 = scmp.eq.s32.totalorder %s17, 0
      %p59 = por %p57, %p58
      %p60 = scmp.ne.s32.totalorder %s46, %s47
      %p61 = scmp.eq.s32.totalorder %s18, 1
      %p62 = por %p60, %p61
      %p64 = scmp.ne.s32.totalorder %s47, %s63
      %p65 = scmp.eq.s32.totalorder %s18, 0
      %p66 = por %p64, %p65
      %s67 = ssub.s32 %s12, %s19
      %p68 = scmp.eq.s32.totalorder %s67, 0
      %s70 = sadd.s32 %s69, 1
      %s71 = scalar_select %p68, %s69, %s70
      %p74 = pneg %p68
      %p75 = scmp.eq.s32.totalorder %s12, 1
      %p76 = por %p74, %p75
      %p77 = scmp.ne.s32.totalorder %s69, %s72
      %p78 = scmp.eq.s32.totalorder %s12, 0
      %p79 = por %p77, %p78
      %p80 = scmp.ne.s32.totalorder %s69, %s72
      %p81 = scmp.eq.s32.totalorder %s17, 1
      %p82 = por %p80, %p81
      %p83 = scmp.ne.s32.totalorder %s72, %s73
      %p84 = scmp.eq.s32.totalorder %s17, 0
      %p85 = por %p83, %p84
      %p86 = scmp.ne.s32.totalorder %s72, %s73
      %p87 = scmp.eq.s32.totalorder %s18, 1
      %p88 = por %p86, %p87
      %p90 = scmp.ne.s32.totalorder %s73, %s89
      %p91 = scmp.eq.s32.totalorder %s18, 0
      %p92 = por %p90, %p91
      %p93 = scmp.le.s32.totalorder 1, %s12
      %p94 = scmp.lt.s32.totalorder %s12, 3
      %p95 = pnand %p93, %p94
      %p96 = pneg %p95
      // Predicated region
      $region9: #{rcnn_cell_forward.1} parent=5 // pred_check
        _
      $region10: #{rcnn_cell_forward.1} parent=5 // pred_check_branch
        %98 = sbr.rel (%p95) target = $region12
      $region11: #{rcnn_cell_forward.1} parent=5 // pred_region
        %s99 = ssub.s32 %s12, 1
        // Predicated region
        $region13: #{rcnn_cell_forward.1} parent=11 // pred_check
          %p100 = pneg %p33
        $region14: #{rcnn_cell_forward.1} parent=11 // pred_check_branch
          %102 = sbr.rel (%p100) target = $region16
        $region15: #{rcnn_cell_forward.1} parent=11 // pred_region
          %104 = vsyncadd [#allocation4], 0
          %s106 = sshll.u32 %s0, 4
          %s107 = int_to_ptr.vmem [resolvable:$true] %s106
          %109 = dma.vmem_to_smem %s107, 16, [#allocation2], [#allocation4]
        $region16: #{rcnn_cell_forward.1} parent=11 // pred_fallthru
          _
      $region12: #{rcnn_cell_forward.1} parent=5 // pred_fallthru
        _
      %p110 = scmp.lt.s32.totalorder %s12, 2
      // Predicated region
      $region17: #{rcnn_cell_forward.1} parent=5 // pred_check
        %p111 = pneg %p110
      $region18: #{rcnn_cell_forward.1} parent=5 // pred_check_branch
        %113 = sbr.rel (%p111) target = $region20
      $region19: #{rcnn_cell_forward.1} parent=5 // pred_region
        // Predicated region
        $region21: #{rcnn_cell_forward.1} parent=19 // pred_check
          %p114 = pneg %p53
        $region22: #{rcnn_cell_forward.1} parent=19 // pred_check_branch
          %116 = sbr.rel (%p114) target = $region24
        $region23: #{rcnn_cell_forward.1} parent=19 // pred_region
          %s117 = sand.u32 %s43, 1
          %s118 = scalar_lea.sflag [#allocation3], %s117
          %s119 = sand.u32 %s43, 1
          %s120 = smul.addr %s119, 32
          %s121 = scalar_lea.vmem [#allocation5], %s120
          %123 = vsyncadd %s118, 0
          %s124 = smul.addr %s12, 4
          %s125 = smul.addr %s124, 8
          %s126 = scalar_lea.hbm %s1, %s125
          %s127 = sshll.u32 %s126, 4
          %s128 = int_to_ptr.hbm [resolvable:$true] %s127
          %s129 = sshll.u32 %s121, 4
          %s130 = int_to_ptr.vmem [resolvable:$true] %s129
          %135 = dma.hbm_to_vmem [thread:$0]  %s128, 512, %s130, %s118, 128, 128, 8
        $region24: #{rcnn_cell_forward.1} parent=19 // pred_fallthru
          _
      $region20: #{rcnn_cell_forward.1} parent=5 // pred_fallthru
        _
      %p136 = scmp.le.s32.totalorder 1, %s12
      %p137 = scmp.lt.s32.totalorder %s12, 3
      %p138 = pnand %p136, %p137
      %p139 = pneg %p138
      // Predicated region
      $region25: #{rcnn_cell_forward.1} parent=5 // pred_check
        _
      $region26: #{rcnn_cell_forward.1} parent=5 // pred_check_branch
        %141 = sbr.rel (%p138) target = $region28
      $region27: #{rcnn_cell_forward.1} parent=5 // pred_region
        %s142 = ssub.s32 %s12, 1
        // Predicated region
        $region29: #{rcnn_cell_forward.1} parent=27 // pred_check
          %p143 = pneg %p33
        $region30: #{rcnn_cell_forward.1} parent=27 // pred_check_branch
          %145 = sbr.rel (%p143) target = $region32
        $region31: #{rcnn_cell_forward.1} parent=27 // pred_region
          %147 = dma.done [#allocation4], 16
        $region32: #{rcnn_cell_forward.1} parent=27 // pred_fallthru
          _
        %s148 = sand.u32 %s46, 1
        %s149 = scalar_lea.sflag [#allocation3], %s148
        %s150 = sand.u32 %s46, 1
        %s151 = smul.addr %s150, 32
        %s152 = scalar_lea.vmem [#allocation5], %s151
        // Predicated region
        $region33: #{rcnn_cell_forward.1} parent=27 // pred_check
          %p153 = pneg %p59
        $region34: #{rcnn_cell_forward.1} parent=27 // pred_check_branch
          %155 = sbr.rel (%p153) target = $region36
        $region35: #{rcnn_cell_forward.1} parent=27 // pred_region
          %157 = dma.done %s149, 512
        $region36: #{rcnn_cell_forward.1} parent=27 // pred_fallthru
          _
        %158 = sfence
        %p159 = pneg %p33
        %p160 = pneg %p30
        %s161 = sand.u32 %s46, 1
        %s162 = scalar_lea.sflag [#allocation3], %s161
        %s163 = sand.u32 %s46, 1
        %s164 = smul.addr %s163, 32
        %s165 = scalar_lea.vmem [#allocation5], %s164
        %p166 = pneg %p59
        %p167 = pneg %p56
        %p168 = pneg %p85
        %p169 = pneg %p82
        %p170 = scmp.lt.s32.totalorder %s17, 1
        %s171 = scalar_select %p170, %s17, 1
        %s172 = smul.addr %s171, 4
        %s173 = smul.addr %s172, 8
        %s174 = scalar_lea.vmem %s2, %s173
        %p175 = scmp.lt.s32.totalorder %s17, 1
        %s176 = scalar_select %p175, %s17, 1
        %s177 = smul.addr %s176, 4
        %s178 = smul.addr %s177, 8
        %s179 = scalar_lea.vmem %s2, %s178
        %s180 = sld [smem:[#allocation2]]
        %s181 = sld [smem:[#allocation2 + $0x1]]
        %s182 = sld [smem:[#allocation2 + $0x2]]
        %s183 = sld [smem:[#allocation2 + $0x3]]
        %s184 = sld [smem:[#allocation2 + $0x4]]
        %s185 = sld [smem:[#allocation2 + $0x5]]
        %v186 = vld [vmem:[%s152] sm:$0xff]
        %v187 = vld [vmem:[%s152 + $0x8] sm:$0xff]
        %v188 = vld [vmem:[%s152 + $0x10] sm:$0xff]
        %v189 = vld [vmem:[%s152 + $0x18] sm:$0xff]
        %v190 = vrot.slane %v186, 1
        %v191 = vrot.slane %v188, 1
        %v192 = vrot.slane %v187, 1
        %v193 = vrot.slane %v189, 1
        %v194 = vlaneseq
        %v195 = vshrl.u32 %v194, 7
        %vm196 = vcmp.lt.s32.totalorder %v195, 7
        %v197 = vsel %vm196, %v190, %v192
        %v198 = vsel %vm196, %v191, %v193
        %v199 = vsel %vm196, %v192, %v190
        %v200 = vsel %vm196, %v193, %v191
        %v201 = vrot.slane %v186, 7
        %v202 = vrot.slane %v188, 7
        %v203 = vrot.slane %v187, 7
        %v204 = vrot.slane %v189, 7
        %vm205 = vcmp.lt.s32.totalorder %v195, 1
        %v206 = vsel %vm205, %v201, %v203
        %v207 = vsel %vm205, %v202, %v204
        %v208 = vsel %vm205, %v203, %v201
        %v209 = vsel %vm205, %v204, %v202
        %v210 = vsub.f32 %v197, %v208
        %v211 = vsub.f32 %v199, %v206
        %v212 = vsub.f32 %v198, %v209
        %v213 = vsub.f32 %v200, %v207
        %v214 = vadd.f32 %v197, %v208
        %v215 = vadd.f32 %v199, %v206
        %v216 = vadd.f32 %v198, %v209
        %v217 = vadd.f32 %v200, %v207
        %v218 = vrot.slane %v186, 2
        %v219 = vrot.slane %v188, 2
        %v220 = vrot.slane %v187, 2
        %v221 = vrot.slane %v189, 2
        %vm222 = vcmp.lt.s32.totalorder %v195, 6
        %v223 = vsel %vm222, %v218, %v220
        %v224 = vsel %vm222, %v219, %v221
        %v225 = vsel %vm222, %v220, %v218
        %v226 = vsel %vm222, %v221, %v219
        %v227 = vrot.slane %v186, 6
        %v228 = vrot.slane %v188, 6
        %v229 = vrot.slane %v187, 6
        %v230 = vrot.slane %v189, 6
        %vm231 = vcmp.lt.s32.totalorder %v195, 2
        %v232 = vsel %vm231, %v227, %v229
        %v233 = vsel %vm231, %v228, %v230
        %v234 = vsel %vm231, %v229, %v227
        %v235 = vsel %vm231, %v230, %v228
        %v236 = vmul.f32 %v210, 8.0
        %v237 = vmul.f32 %v211, 8.0
        %v238 = vmul.f32 %v212, 8.0
        %v239 = vmul.f32 %v213, 8.0
        %v240 = vsub.f32 %v223, %v234
        %v241 = vsub.f32 %v225, %v232
        %v242 = vsub.f32 %v224, %v235
        %v243 = vsub.f32 %v226, %v233
        %v244 = vsub.f32 %v236, %v240
        %v245 = vsub.f32 %v237, %v241
        %v246 = vsub.f32 %v238, %v242
        %v247 = vsub.f32 %v239, %v243
        %v248 = vmul.f32 %v214, 16.0
        %v249 = vmul.f32 %v215, 16.0
        %v250 = vmul.f32 %v216, 16.0
        %v251 = vmul.f32 %v217, 16.0
        %v252 = vadd.f32 %v223, %v234
        %v253 = vadd.f32 %v225, %v232
        %v254 = vadd.f32 %v224, %v235
        %v255 = vadd.f32 %v226, %v233
        %v256 = vsub.f32 %v248, %v252
        %v257 = vsub.f32 %v249, %v253
        %v258 = vsub.f32 %v250, %v254
        %v259 = vsub.f32 %v251, %v255
        %260 = vrot.lane.b32.xlu0 %v186, 127
        %v261 = vpop.permute.xlu0 %260
        %262 = vrot.lane.b32.xlu0 %v187, 127
        %v263 = vpop.permute.xlu0 %262
        %264 = vrot.lane.b32.xlu0 %v188, 127
        %v265 = vpop.permute.xlu0 %264
        %266 = vrot.lane.b32.xlu0 %v189, 127
        %v267 = vpop.permute.xlu0 %266
        %268 = vrot.lane.b32.xlu0 %v186, 1
        %v269 = vpop.permute.xlu0 %268
        %270 = vrot.lane.b32.xlu0 %v187, 1
        %v271 = vpop.permute.xlu0 %270
        %272 = vrot.lane.b32.xlu0 %v188, 1
        %v273 = vpop.permute.xlu0 %272
        %274 = vrot.lane.b32.xlu0 %v189, 1
        %v275 = vpop.permute.xlu0 %274
        %v276 = vsub.f32 %v261, %v269
        %v277 = vsub.f32 %v263, %v271
        %v278 = vsub.f32 %v265, %v273
        %v279 = vsub.f32 %v267, %v275
        %v280 = vadd.f32 %v261, %v269
        %v281 = vadd.f32 %v263, %v271
        %v282 = vadd.f32 %v265, %v273
        %v283 = vadd.f32 %v267, %v275
        %v284 = vmul.f32 %v280, 16.0
        %v285 = vmul.f32 %v281, 16.0
        %v286 = vmul.f32 %v282, 16.0
        %v287 = vmul.f32 %v283, 16.0
        %v288 = vadd.f32 %v256, %v284
        %v289 = vadd.f32 %v257, %v285
        %v290 = vadd.f32 %v258, %v286
        %v291 = vadd.f32 %v259, %v287
        %292 = vrot.lane.b32.xlu0 %v186, 126
        %v293 = vpop.permute.xlu0 %292
        %294 = vrot.lane.b32.xlu0 %v187, 126
        %v295 = vpop.permute.xlu0 %294
        %296 = vrot.lane.b32.xlu0 %v188, 126
        %v297 = vpop.permute.xlu0 %296
        %298 = vrot.lane.b32.xlu0 %v189, 126
        %v299 = vpop.permute.xlu0 %298
        %300 = vrot.lane.b32.xlu0 %v186, 2
        %v301 = vpop.permute.xlu0 %300
        %302 = vrot.lane.b32.xlu0 %v187, 2
        %v303 = vpop.permute.xlu0 %302
        %304 = vrot.lane.b32.xlu0 %v188, 2
        %v305 = vpop.permute.xlu0 %304
        %306 = vrot.lane.b32.xlu0 %v189, 2
        %v307 = vpop.permute.xlu0 %306
        %v308 = vmul.f32 %v276, 8.0
        %v309 = vmul.f32 %v277, 8.0
        %v310 = vmul.f32 %v278, 8.0
        %v311 = vmul.f32 %v279, 8.0
        %v312 = vsub.f32 %v293, %v301
        %v313 = vsub.f32 %v295, %v303
        %v314 = vsub.f32 %v297, %v305
        %v315 = vsub.f32 %v299, %v307
        %v316 = vsub.f32 %v308, %v312
        %v317 = vsub.f32 %v309, %v313
        %v318 = vsub.f32 %v310, %v314
        %v319 = vsub.f32 %v311, %v315
        %v320 = vadd.f32 %v293, %v301
        %v321 = vadd.f32 %v295, %v303
        %v322 = vadd.f32 %v297, %v305
        %v323 = vadd.f32 %v299, %v307
        %v324 = vsub.f32 %v288, %v320
        %v325 = vsub.f32 %v289, %v321
        %v326 = vsub.f32 %v290, %v322
        %v327 = vsub.f32 %v291, %v323
        %v328 = vmul.f32 %v186, 60.0
        %v329 = vmul.f32 %v187, 60.0
        %v330 = vmul.f32 %v188, 60.0
        %v331 = vmul.f32 %v189, 60.0
        %v332 = vsub.f32 %v324, %v328
        %v333 = vsub.f32 %v325, %v329
        %v334 = vsub.f32 %v326, %v330
        %v335 = vsub.f32 %v327, %v331
        %v336 = vstv %s180
        %v337 = vmul.f32 %v336, %v332
        %v338 = vmul.f32 %v336, %v333
        %v339 = vadd.f32 %v186, %v337
        %v340 = vadd.f32 %v187, %v338
        %v341 = vstv %s182
        %v342 = vmul.f32 %v341, %v186
        %v343 = vmul.f32 %v341, %v187
        %v344 = vmul.f32 %v342, %v244
        %v345 = vmul.f32 %v343, %v245
        %v346 = vadd.f32 %v339, %v344
        %v347 = vadd.f32 %v340, %v345
        %v348 = vstv %s183
        %v349 = vmul.f32 %v348, %v188
        %v350 = vmul.f32 %v348, %v189
        %v351 = vmul.f32 %v349, %v316
        %v352 = vmul.f32 %v350, %v317
        %v353 = vadd.f32 %v346, %v351
        %v354 = vadd.f32 %v347, %v352
        %v355 = vstv %s181
        %v356 = vmul.f32 %v355, %v334
        %v357 = vmul.f32 %v355, %v335
        %v358 = vadd.f32 %v188, %v356
        %v359 = vadd.f32 %v189, %v357
        %v360 = vstv %s184
        %v361 = vmul.f32 %v360, %v186
        %v362 = vmul.f32 %v360, %v187
        %v363 = vmul.f32 %v361, %v246
        %v364 = vmul.f32 %v362, %v247
        %v365 = vadd.f32 %v358, %v363
        %v366 = vadd.f32 %v359, %v364
        %v367 = vstv %s185
        %v368 = vmul.f32 %v367, %v188
        %v369 = vmul.f32 %v367, %v189
        %v370 = vmul.f32 %v368, %v318
        %v371 = vmul.f32 %v369, %v319
        %v372 = vadd.f32 %v365, %v370
        %v373 = vadd.f32 %v366, %v371
        %374 = vst [vmem:[%s179] sm:$0xff] %v353
        %375 = vst [vmem:[%s179 + $0x8] sm:$0xff] %v354
        %376 = vst [vmem:[%s179 + $0x10] sm:$0xff] %v372
        %377 = vst [vmem:[%s179 + $0x18] sm:$0xff] %v373
        %p378 = scmp.lt.s32.totalorder %s17, 1
        %s379 = scalar_select %p378, %s17, 1
        %s380 = smul.addr %s379, 4
        %s381 = smul.addr %s380, 8
        %s382 = scalar_lea.vmem %s2, %s381
        // Predicated region
        $region37: #{rcnn_cell_forward.1} parent=27 // pred_check
          %p383 = pneg %p82
        $region38: #{rcnn_cell_forward.1} parent=27 // pred_check_branch
          %385 = sbr.rel (%p383) target = $region40
        $region39: #{rcnn_cell_forward.1} parent=27 // pred_region
          _
        $region40: #{rcnn_cell_forward.1} parent=27 // pred_fallthru
          _
      $region28: #{rcnn_cell_forward.1} parent=5 // pred_fallthru
        _
      %p386 = scmp.le.s32.totalorder 2, %s12
      // Predicated region
      $region41: #{rcnn_cell_forward.1} parent=5 // pred_check
        %p387 = pneg %p386
      $region42: #{rcnn_cell_forward.1} parent=5 // pred_check_branch
        %389 = sbr.rel (%p387) target = $region44
      $region43: #{rcnn_cell_forward.1} parent=5 // pred_region
        %s390 = ssub.s32 %s12, 2
        // Predicated region
        $region45: #{rcnn_cell_forward.1} parent=43 // pred_check
          %p391 = pneg %p88
        $region46: #{rcnn_cell_forward.1} parent=43 // pred_check_branch
          %393 = sbr.rel (%p391) target = $region48
        $region47: #{rcnn_cell_forward.1} parent=43 // pred_region
          %p394 = scmp.lt.s32.totalorder %s18, 1
          %s395 = scalar_select %p394, %s18, 1
          %s396 = smul.addr %s395, 4
          %s397 = smul.addr %s396, 8
          %s398 = scalar_lea.vmem %s2, %s397
        $region48: #{rcnn_cell_forward.1} parent=43 // pred_fallthru
          _
      $region44: #{rcnn_cell_forward.1} parent=5 // pred_fallthru
        _
    $region6: #{rcnn_cell_forward.1} parent=1 // loop_footer
      %s16 = sadd.s32 1, %s12
    $region7: #{rcnn_cell_forward.1} parent=1 // loop_footer_branch
      %11 = sbr.rel target = $region3
    $region8: #{rcnn_cell_forward.1} parent=1 // loop_exit
      _
    %399 = vsyncpa [#allocation3], 1
    %s400 = scalar_lea.sflag [#allocation3], 1
    %401 = vsyncpa %s400, 1
    %402 = vsyncpa [#allocation4], 1
    %s403 = scalar_lea.sflag [#allocation4], 1
    %404 = vsyncpa %s403, 1

</llo_original>
